<compile_context>
chip_gen: v7x
topology: tpu7x:2x2x1
jax: 0.10.0
libtpu: 0.0.40
codegen_flags: <defaults>
</compile_context>

<pallas_src>
import functools

import jax
import jax.numpy as jnp
import numpy as np
from jax.experimental import pallas as pl
from jax.experimental.pallas import tpu as pltpu


def _head_kernel(feat_ref, wl_ref, scale_ref, shift_ref, wfc_ref, bfc_ref,
                 gfeat_ref, lfeat_ref, logits_ref):
    """Head for a block of B images.

    feat_ref   : [B, W, H, C]  bf16 backbone feature map block (NCHW -> NWHC)
    wl_ref     : [C, K]        bf16 1x1 local conv weight (transposed)
    scale_ref  : [1, K]        f32 folded (conv bias + BN) scale
    shift_ref  : [1, K]        f32 folded (conv bias + BN) shift
    wfc_ref    : [C, NCp]      bf16 fc weight (transposed, lane-padded)
    bfc_ref    : [1, NCp]      f32 fc bias (lane-padded)
    gfeat_ref  : [B, C]        f32 global feature (spatial mean)
    lfeat_ref  : [B*H, K]      f32 local feature (width mean -> conv -> bn -> relu)
    logits_ref : [B, NCp]      f32 classifier logits
    """
    B, W, H, C = feat_ref.shape

    # Width mean (== torch.mean(feat, -1, keepdim=True)) accumulated in f32
    # one W-slice at a time: never materializes a [B, W, H, C] f32 copy of the
    # bf16 input block (cuts peak VMEM / vreg pressure roughly in half).
    lm = feat_ref[:, 0, :, :].astype(jnp.float32)              # [B, H, C]
    for w in range(1, W):                                      # W is small & static
        lm = lm + feat_ref[:, w, :, :].astype(jnp.float32)
    lm = lm * jnp.float32(1.0 / W)

    # Global average pool reuses the width mean: mean_H(mean_W(x)) == mean_{H,W}(x).
    g = jnp.mean(lm, axis=1)                                   # [B, C]
    gfeat_ref[...] = g

    # 1x1 local conv == [B*H, C] @ [C, K] on the MXU (bf16 in, f32 accumulate),
    # then folded (conv bias + eval-mode BN) scale/shift and ReLU.
    lm2 = lm.reshape(B * H, C).astype(wl_ref.dtype)            # layout-free when H % 8 == 0
    z = jnp.dot(lm2, wl_ref[...], preferred_element_type=jnp.float32)   # [B*H, K]
    z = z * scale_ref[0, :] + shift_ref[0, :]
    lfeat_ref[...] = jnp.maximum(z, 0.0)

    # Classifier on the global feature: [B, C] @ [C, NCp].
    logits = jnp.dot(g.astype(wfc_ref.dtype), wfc_ref[...],
                     preferred_element_type=jnp.float32) + bfc_ref[0, :]
    logits_ref[...] = logits


def _round_up(x, m):
    return ((x + m - 1) // m) * m


def _vmem_limit_bytes():
    """Chip-aware scoped VMEM limit: ~half of physical VMEM, capped at 64 MiB.
    v5e/v6e (128 MiB) -> 64 MiB, v7x (64 MiB) -> 32 MiB, unknown -> 32 MiB."""
    try:
        cap = int(pltpu.get_tpu_info().vmem_capacity_bytes)
    except Exception:
        cap = 64 * 1024 * 1024
    return int(min(cap // 2, 64 * 1024 * 1024))


_VMEM_LIMIT_BYTES = _vmem_limit_bytes()


def _weight_vmem_bytes(C, K, NCp):
    # Single-buffered (pipeline_mode=pl.Buffered(1)) weight / vector operands.
    return C * K * 2 + C * NCp * 2 + 4 * (2 * K + NCp)


def _per_image_vmem_bytes(W, H, C, K, NCp):
    feat_in = 2 * (W * H * C * 2)                    # double-buffered bf16 input block
    outs = 2 * 4 * (C + H * K + NCp)                 # double-buffered f32 output blocks
    # in-kernel temps: f32 lm accumulator + one f32 W-slice + bf16 lm2 + f32 z
    temps = 4 * H * C + 4 * H * C + 2 * H * C + 4 * H * K
    return feat_in + outs + temps


def _choose_block_images(N, b_cap):
    """Largest B that divides N exactly (no wrapper pad => no extra HBM pass),
    is a multiple of 8 (8-aligned 2nd-minor output dims) and fits the VMEM
    budget; prefer an even number of blocks (keeps both v7x TCs busy)."""
    divisors = [b for b in range(8, N + 1, 8) if N % b == 0 and b <= b_cap]
    if divisors:
        even = [b for b in divisors if (N // b) % 2 == 0]
        pool = even if even else divisors
        return max(pool)
    if N <= b_cap:
        return N                 # single full-batch block (block dims == array dims)
    # Fallback: ragged batch -> wrapper pads (extra HBM pass; avoided above).
    return max(8, (min(b_cap, N) // 8) * 8)


def prepare_head_params(w_local, b_local, bn_gamma, bn_beta, bn_mean, bn_var,
                        w_fc, b_fc, eps=1e-5):
    """One-time weight preprocessing, hoisted out of the per-step hot path:
    fold local_conv bias + eval-mode local_bn into per-channel scale/shift,
    cast matmul weights to bf16, lane-pad the classifier to a multiple of 128.
    TODO(synk): training-mode BN (batch statistics) is not folded here.
    """
    K = w_local.shape[1]
    NC = w_fc.shape[1]
    NCp = _round_up(NC, 128)
    inv_std = 1.0 / jnp.sqrt(bn_var + eps)
    scale = (bn_gamma * inv_std).reshape(1, K).astype(jnp.float32)
    shift = ((b_local - bn_mean) * bn_gamma * inv_std + bn_beta).reshape(1, K)
    shift = shift.astype(jnp.float32)
    wl = w_local.astype(jnp.bfloat16)                                   # [C, K]
    wfc = jnp.pad(w_fc, ((0, 0), (0, NCp - NC))).astype(jnp.bfloat16)   # [C, NCp]
    bfc = jnp.pad(b_fc.reshape(1, NC), ((0, 0), (0, NCp - NC))).astype(jnp.float32)
    return wl, scale, shift, wfc, bfc


@functools.partial(jax.jit, static_argnames=("num_classes", "block_images"))
def aligned_reid_head(feat_nwhc, w_local, scale, shift, w_fc, b_fc, *,
                      num_classes, block_images=None):
    """train_base head. feat_nwhc is the backbone map transposed to [N, W, H, C]
    (bf16 preferred). Weights come pre-processed from prepare_head_params.

    Returns (global_feat [N, C], local_feat [N, H, K], logits [N, num_classes]) in f32.
    """
    N, W, H, C = feat_nwhc.shape
    K = w_local.shape[1]
    NCp = w_fc.shape[1]

    feat = feat_nwhc.astype(jnp.bfloat16)        # no-op when backbone already emits bf16

    # ---- explicit VMEM model for the block size B.
    budget = int(0.7 * _VMEM_LIMIT_BYTES) - _weight_vmem_bytes(C, K, NCp)
    per_img = max(1, _per_image_vmem_bytes(W, H, C, K, NCp))
    b_cap = max(1, budget // per_img)
    if block_images is not None:
        B = max(1, min(N, int(block_images)))
        if B < N:
            B = max(8, (B // 8) * 8)
    else:
        B = _choose_block_images(N, b_cap)
    n_blocks = (N + B - 1) // B
    Npad = n_blocks * B
    if Npad != N:
        # TODO(synk): ragged last block — costs one extra HBM pass over feat;
        # _choose_block_images avoids this whenever a divisor of N fits VMEM.
        feat = jnp.pad(feat, ((0, Npad - N), (0, 0), (0, 0), (0, 0)))

    flops = 2 * Npad * (H * C * K + C * NCp)
    bytes_accessed = (feat.size * 2 + w_local.size * 2 + w_fc.size * 2
                      + (scale.size + shift.size + b_fc.size) * 4
                      + Npad * (C + H * K + NCp) * 4)

    # grid-invariant operands: constant index_map => fetched once; Buffered(1)
    # drops the unused second VMEM buffer.
    def const_spec(shape):
        return pl.BlockSpec(shape, lambda n: (0, 0), pipeline_mode=pl.Buffered(1))

    gfeat, lfeat, logits = pl.pallas_call(
        _head_kernel,
        out_shape=(
            jax.ShapeDtypeStruct((Npad, C), jnp.float32),
            jax.ShapeDtypeStruct((Npad * H, K), jnp.float32),
            jax.ShapeDtypeStruct((Npad, NCp), jnp.float32),
        ),
        grid_spec=pltpu.PrefetchScalarGridSpec(
            num_scalar_prefetch=0,
            grid=(n_blocks,),
            in_specs=[
                pl.BlockSpec((B, W, H, C), lambda n: (n, 0, 0, 0)),
                const_spec((C, K)),
                const_spec((1, K)),
                const_spec((1, K)),
                const_spec((C, NCp)),
                const_spec((1, NCp)),
            ],
            out_specs=[
                pl.BlockSpec((B, C), lambda n: (n, 0)),
                pl.BlockSpec((B * H, K), lambda n: (n, 0)),
                pl.BlockSpec((B, NCp), lambda n: (n, 0)),
            ],
        ),
        compiler_params=pltpu.CompilerParams(
            dimension_semantics=("parallel",),
            vmem_limit_bytes=_VMEM_LIMIT_BYTES),
        cost_estimate=pl.CostEstimate(
            flops=flops, transcendentals=0, bytes_accessed=bytes_accessed),
    )(feat, w_local, scale, shift, w_fc, b_fc)

    global_feat = gfeat[:N]                              # [N, C]
    local_feat = lfeat.reshape(Npad, H, K)[:N]           # [N, H, K]
    return global_feat, local_feat, logits[:N, :num_classes]


def _reference_head(feat_nchw, w_local, scale, shift, w_fc, b_fc):
    """Pure-JAX reference mirroring the PyTorch head (eval-mode BN, folded),
    with the same bf16 input rounding as the kernel."""
    f = feat_nchw.astype(jnp.bfloat16).astype(jnp.float32)
    wl = w_local.astype(jnp.bfloat16).astype(jnp.float32)
    wfc = w_fc.astype(jnp.bfloat16).astype(jnp.float32)

    lm = f.mean(axis=3)                                   # [N, C, H]   mean over W
    g = lm.mean(axis=2)                                   # [N, C]      == mean over (H, W)

    lm_b = lm.astype(jnp.bfloat16).astype(jnp.float32)
    z = jnp.einsum('nch,ck->nhk', lm_b, wl,
                   preferred_element_type=jnp.float32)    # [N, H, K]
    z = z * scale[0] + shift[0]
    local = jnp.maximum(z, 0.0)

    g_b = g.astype(jnp.bfloat16).astype(jnp.float32)
    logits = jnp.dot(g_b, wfc, preferred_element_type=jnp.float32) + b_fc
    return g, local, logits


if __name__ == "__main__":
    # Small shapes consistent with the head (scaled down from C=2048, NC~751).
    N, C, H, W = 16, 256, 8, 4
    K = 128            # local_conv_out_channels
    NC = 16            # num_classes

    key = jax.random.PRNGKey(0)
    k_feat, k_wl, k_bl, k_g, k_b, k_m, k_v, k_fc = jax.random.split(key, 8)

    # Backbone feature map stand-in (NCHW as PyTorch produces it).
    feat_nchw = jax.random.normal(k_feat, (N, C, H, W), dtype=jnp.float32)

    # local_conv: Conv2d(C, K, 1) — kaiming-ish fan_in init + bias.
    w_local = jax.random.normal(k_wl, (C, K), dtype=jnp.float32) * np.sqrt(2.0 / C)
    b_local = jax.random.normal(k_bl, (K,), dtype=jnp.float32) * 0.01

    # local_bn: BatchNorm2d(K), eval-mode running statistics.
    bn_gamma = 1.0 + 0.02 * jax.random.normal(k_g, (K,), dtype=jnp.float32)
    bn_beta = 0.01 * jax.random.normal(k_b, (K,), dtype=jnp.float32)
    bn_mean = 0.01 * jax.random.normal(k_m, (K,), dtype=jnp.float32)
    bn_var = 1.0 + 0.1 * jnp.abs(jax.random.normal(k_v, (K,), dtype=jnp.float32))

    # fc: Linear(C, NC), init.normal_(std=0.001), bias = 0.
    w_fc = (0.001 * jax.random.normal(k_fc, (NC, C), dtype=jnp.float32)).T  # [C, NC]
    b_fc = jnp.zeros((NC,), dtype=jnp.float32)

    # One-time weight prep (cached across steps in a real training loop).
    wl_p, scale_p, shift_p, wfc_p, bfc_p = prepare_head_params(
        w_local, b_local, bn_gamma, bn_beta, bn_mean, bn_var, w_fc, b_fc)

    # Cast to bf16 BEFORE the relayout so the transpose moves half the bytes;
    # ideally the backbone would emit [N, W, H, C] bf16 directly.
    feat_nwhc = jnp.transpose(feat_nchw.astype(jnp.bfloat16), (0, 3, 2, 1))

    global_feat, local_feat, logits = aligned_reid_head(
        feat_nwhc, wl_p, scale_p, shift_p, wfc_p, bfc_p, num_classes=NC)
    jax.block_until_ready((global_feat, local_feat, logits))

    # Correctness check against the pure-JAX reference of the PyTorch code.
    g_ref, l_ref, lg_ref = _reference_head(feat_nchw, w_local, scale_p, shift_p, w_fc, b_fc)
    np.testing.assert_allclose(np.asarray(global_feat), np.asarray(g_ref), rtol=1e-3, atol=1e-3)
    np.testing.assert_allclose(np.asarray(local_feat), np.asarray(l_ref), rtol=1e-3, atol=1e-3)
    np.testing.assert_allclose(np.asarray(logits), np.asarray(lg_ref), rtol=1e-2, atol=1e-4)

    assert global_feat.shape == (N, C)
    assert local_feat.shape == (N, H, K)
    assert logits.shape == (N, NC)

    print("KERNEL_OK")
</pallas_src>

<mosaic_0001>
module attributes {stable_mosaic.version = 11 : i64} {
  func.func @_head_kernel(%arg0: i32, %arg1: memref<8x4x8x256xbf16, #tpu.memory_space<vmem>>, %arg2: memref<256x128xbf16, #tpu.memory_space<vmem>>, %arg3: memref<1x128xf32, #tpu.memory_space<vmem>>, %arg4: memref<1x128xf32, #tpu.memory_space<vmem>>, %arg5: memref<256x128xbf16, #tpu.memory_space<vmem>>, %arg6: memref<1x128xf32, #tpu.memory_space<vmem>>, %arg7: memref<8x256xf32, #tpu.memory_space<vmem>>, %arg8: memref<64x128xf32, #tpu.memory_space<vmem>>, %arg9: memref<8x128xf32, #tpu.memory_space<vmem>>) attributes {dimension_semantics = [#tpu.dimension_semantics<parallel>], iteration_bounds = array<i64: 2>, scalar_prefetch = 0 : i64, scratch_operands = 0 : i64, tpu.core_type = #tpu.core_type<tc>, window_params = [{transform_indices = @transform_0, window_bounds = array<i64: 8, 4, 8, 256>}, {pipeline_mode = #tpu.pipeline_mode<synchronous>, transform_indices = @transform_1, window_bounds = array<i64: 256, 128>}, {pipeline_mode = #tpu.pipeline_mode<synchronous>, transform_indices = @transform_2, window_bounds = array<i64: 1, 128>}, {pipeline_mode = #tpu.pipeline_mode<synchronous>, transform_indices = @transform_3, window_bounds = array<i64: 1, 128>}, {pipeline_mode = #tpu.pipeline_mode<synchronous>, transform_indices = @transform_4, window_bounds = array<i64: 256, 128>}, {pipeline_mode = #tpu.pipeline_mode<synchronous>, transform_indices = @transform_5, window_bounds = array<i64: 1, 128>}, {transform_indices = @transform_6, window_bounds = array<i64: 8, 256>}, {transform_indices = @transform_7, window_bounds = array<i64: 64, 128>}, {transform_indices = @transform_8, window_bounds = array<i64: 8, 128>}]} {
    %c0 = arith.constant 0 : index
    %c0_0 = arith.constant 0 : index
    %c0_1 = arith.constant 0 : index
    %c0_2 = arith.constant 0 : index
    %0 = vector.load %arg1[%c0, %c0_0, %c0_1, %c0_2] : memref<8x4x8x256xbf16, #tpu.memory_space<vmem>>, vector<8x1x8x256xbf16>
    %1 = vector.shape_cast %0 : vector<8x1x8x256xbf16> to vector<8x8x256xbf16>
    %2 = arith.extf %1 : vector<8x8x256xbf16> to vector<8x8x256xf32>
    %c0_3 = arith.constant 0 : index
    %c1 = arith.constant 1 : index
    %c0_4 = arith.constant 0 : index
    %c0_5 = arith.constant 0 : index
    %3 = vector.load %arg1[%c0_3, %c1, %c0_4, %c0_5] : memref<8x4x8x256xbf16, #tpu.memory_space<vmem>>, vector<8x1x8x256xbf16>
    %4 = vector.shape_cast %3 : vector<8x1x8x256xbf16> to vector<8x8x256xbf16>
    %5 = arith.extf %4 : vector<8x8x256xbf16> to vector<8x8x256xf32>
    %6 = arith.addf %2, %5 : vector<8x8x256xf32>
    %c0_6 = arith.constant 0 : index
    %c2 = arith.constant 2 : index
    %c0_7 = arith.constant 0 : index
    %c0_8 = arith.constant 0 : index
    %7 = vector.load %arg1[%c0_6, %c2, %c0_7, %c0_8] : memref<8x4x8x256xbf16, #tpu.memory_space<vmem>>, vector<8x1x8x256xbf16>
    %8 = vector.shape_cast %7 : vector<8x1x8x256xbf16> to vector<8x8x256xbf16>
    %9 = arith.extf %8 : vector<8x8x256xbf16> to vector<8x8x256xf32>
    %10 = arith.addf %6, %9 : vector<8x8x256xf32>
    %c0_9 = arith.constant 0 : index
    %c3 = arith.constant 3 : index
    %c0_10 = arith.constant 0 : index
    %c0_11 = arith.constant 0 : index
    %11 = vector.load %arg1[%c0_9, %c3, %c0_10, %c0_11] : memref<8x4x8x256xbf16, #tpu.memory_space<vmem>>, vector<8x1x8x256xbf16>
    %12 = vector.shape_cast %11 : vector<8x1x8x256xbf16> to vector<8x8x256xbf16>
    %13 = arith.extf %12 : vector<8x8x256xbf16> to vector<8x8x256xf32>
    %14 = arith.addf %10, %13 : vector<8x8x256xf32>
    %cst = arith.constant 2.500000e-01 : f32
    %15 = vector.broadcast %cst : f32 to vector<8x8x256xf32>
    %16 = arith.mulf %14, %15 : vector<8x8x256xf32>
    %cst_12 = arith.constant dense<0.000000e+00> : vector<8x256xf32>
    %17 = vector.multi_reduction <add>, %16, %cst_12 [1] : vector<8x8x256xf32> to vector<8x256xf32>
    %cst_13 = arith.constant 8.000000e+00 : f32
    %18 = vector.broadcast %cst_13 : f32 to vector<8x256xf32>
    %19 = arith.divf %17, %18 : vector<8x256xf32>
    %c0_14 = arith.constant 0 : index
    %c0_15 = arith.constant 0 : index
    %20 = vector.load %arg7[%c0_14, %c0_15] : memref<8x256xf32, #tpu.memory_space<vmem>>, vector<8x256xf32>
    tpu.vector_store %arg7[%c0_14, %c0_15], %19 {strides = array<i32>} : memref<8x256xf32, #tpu.memory_space<vmem>>, vector<8x256xf32>,
    %21 = vector.shape_cast %16 : vector<8x8x256xf32> to vector<64x256xf32>
    %22 = arith.truncf %21 : vector<64x256xf32> to vector<64x256xbf16>
    %c0_16 = arith.constant 0 : index
    %c0_17 = arith.constant 0 : index
    %23 = vector.load %arg2[%c0_16, %c0_17] : memref<256x128xbf16, #tpu.memory_space<vmem>>, vector<256x128xbf16>
    %cst_18 = arith.constant dense<0.000000e+00> : vector<64x128xf32>
    %24 = tpu.matmul %22, %23, %cst_18 {dimension_numbers = #tpu.dot_dimension_numbers<[1], [0], [0], [1], [0, 0, 1, 1], [], []>} : vector<64x256xbf16>, vector<256x128xbf16>, vector<64x128xf32> -> vector<64x128xf32>
    %c0_19 = arith.constant 0 : index
    %c0_20 = arith.constant 0 : index
    %25 = vector.load %arg3[%c0_19, %c0_20] : memref<1x128xf32, #tpu.memory_space<vmem>>, vector<1x128xf32>
    %26 = vector.shape_cast %25 : vector<1x128xf32> to vector<128xf32>
    %27 = vector.shape_cast %26 : vector<128xf32> to vector<1x128xf32>
    %28 = vector.broadcast %27 : vector<1x128xf32> to vector<64x128xf32>
    %29 = arith.mulf %24, %28 : vector<64x128xf32>
    %c0_21 = arith.constant 0 : index
    %c0_22 = arith.constant 0 : index
    %30 = vector.load %arg4[%c0_21, %c0_22] : memref<1x128xf32, #tpu.memory_space<vmem>>, vector<1x128xf32>
    %31 = vector.shape_cast %30 : vector<1x128xf32> to vector<128xf32>
    %32 = vector.shape_cast %31 : vector<128xf32> to vector<1x128xf32>
    %33 = vector.broadcast %32 : vector<1x128xf32> to vector<64x128xf32>
    %34 = arith.addf %29, %33 : vector<64x128xf32>
    %cst_23 = arith.constant 0.000000e+00 : f32
    %35 = vector.broadcast %cst_23 : f32 to vector<64x128xf32>
    %36 = arith.maximumf %34, %35 : vector<64x128xf32>
    %c0_24 = arith.constant 0 : index
    %c0_25 = arith.constant 0 : index
    %37 = vector.load %arg8[%c0_24, %c0_25] : memref<64x128xf32, #tpu.memory_space<vmem>>, vector<64x128xf32>
    tpu.vector_store %arg8[%c0_24, %c0_25], %36 {strides = array<i32>} : memref<64x128xf32, #tpu.memory_space<vmem>>, vector<64x128xf32>,
    %38 = arith.truncf %19 : vector<8x256xf32> to vector<8x256xbf16>
    %c0_26 = arith.constant 0 : index
    %c0_27 = arith.constant 0 : index
    %39 = vector.load %arg5[%c0_26, %c0_27] : memref<256x128xbf16, #tpu.memory_space<vmem>>, vector<256x128xbf16>
    %cst_28 = arith.constant dense<0.000000e+00> : vector<8x128xf32>
    %40 = tpu.matmul %38, %39, %cst_28 {dimension_numbers = #tpu.dot_dimension_numbers<[1], [0], [0], [1], [0, 0, 1, 1], [], []>} : vector<8x256xbf16>, vector<256x128xbf16>, vector<8x128xf32> -> vector<8x128xf32>
    %c0_29 = arith.constant 0 : index
    %c0_30 = arith.constant 0 : index
    %41 = vector.load %arg6[%c0_29, %c0_30] : memref<1x128xf32, #tpu.memory_space<vmem>>, vector<1x128xf32>
    %42 = vector.shape_cast %41 : vector<1x128xf32> to vector<128xf32>
    %43 = vector.shape_cast %42 : vector<128xf32> to vector<1x128xf32>
    %44 = vector.broadcast %43 : vector<1x128xf32> to vector<8x128xf32>
    %45 = arith.addf %40, %44 : vector<8x128xf32>
    %c0_31 = arith.constant 0 : index
    %c0_32 = arith.constant 0 : index
    %46 = vector.load %arg9[%c0_31, %c0_32] : memref<8x128xf32, #tpu.memory_space<vmem>>, vector<8x128xf32>
    tpu.vector_store %arg9[%c0_31, %c0_32], %45 {strides = array<i32>} : memref<8x128xf32, #tpu.memory_space<vmem>>, vector<8x128xf32>,
    return
  }
  func.func @transform_0(%arg0: i32) -> (i32, i32, i32, i32) {
    %c0_i32 = arith.constant 0 : i32
    %c0_i32_0 = arith.constant 0 : i32
    %c0_i32_1 = arith.constant 0 : i32
    %c0_i32_2 = arith.constant 0 : i32
    return %arg0, %c0_i32, %c0_i32_0, %c0_i32_1 : i32, i32, i32, i32
  }
  func.func @transform_1(%arg0: i32) -> (i32, i32) {
    %c0_i32 = arith.constant 0 : i32
    %c0_i32_0 = arith.constant 0 : i32
    %c0_i32_1 = arith.constant 0 : i32
    return %c0_i32, %c0_i32_0 : i32, i32
  }
  func.func @transform_2(%arg0: i32) -> (i32, i32) {
    %c0_i32 = arith.constant 0 : i32
    %c0_i32_0 = arith.constant 0 : i32
    %c0_i32_1 = arith.constant 0 : i32
    return %c0_i32, %c0_i32_0 : i32, i32
  }
  func.func @transform_3(%arg0: i32) -> (i32, i32) {
    %c0_i32 = arith.constant 0 : i32
    %c0_i32_0 = arith.constant 0 : i32
    %c0_i32_1 = arith.constant 0 : i32
    return %c0_i32, %c0_i32_0 : i32, i32
  }
  func.func @transform_4(%arg0: i32) -> (i32, i32) {
    %c0_i32 = arith.constant 0 : i32
    %c0_i32_0 = arith.constant 0 : i32
    %c0_i32_1 = arith.constant 0 : i32
    return %c0_i32, %c0_i32_0 : i32, i32
  }
  func.func @transform_5(%arg0: i32) -> (i32, i32) {
    %c0_i32 = arith.constant 0 : i32
    %c0_i32_0 = arith.constant 0 : i32
    %c0_i32_1 = arith.constant 0 : i32
    return %c0_i32, %c0_i32_0 : i32, i32
  }
  func.func @transform_6(%arg0: i32) -> (i32, i32) {
    %c0_i32 = arith.constant 0 : i32
    %c0_i32_0 = arith.constant 0 : i32
    return %arg0, %c0_i32 : i32, i32
  }
  func.func @transform_7(%arg0: i32) -> (i32, i32) {
    %c0_i32 = arith.constant 0 : i32
    %c0_i32_0 = arith.constant 0 : i32
    return %arg0, %c0_i32 : i32, i32
  }
  func.func @transform_8(%arg0: i32) -> (i32, i32) {
    %c0_i32 = arith.constant 0 : i32
    %c0_i32_0 = arith.constant 0 : i32
    return %arg0, %c0_i32 : i32, i32
  }
}

</mosaic_0001>

<llo_original>
// kernel: aligned_reid_head.1
$region0: #{aligned_reid_head.1}
  #allocation0 [shape = 'u32[]', space=smem, size = 0x4, offset = 0x4, fixed_abs, tag = 'smem constant byte address 0x4 - core index']
  #allocation1 [shape = 'u32[144,128]{1,0:T(1,128)}', space=vmem, size = 0x12000, scoped, tag = 'internal scratch']
  %s0 = inlined_call_operand.hbm [shape: bf16[16,4,8,256], index: 0, kind: input, shape index: {}]
  %s1 = inlined_call_operand.hbm [shape: bf16[256,128], index: 1, kind: input, shape index: {}]
  %s2 = inlined_call_operand.vmem [shape: f32[1,128], index: 2, kind: input, shape index: {}]
  %s3 = inlined_call_operand.vmem [shape: f32[1,128], index: 3, kind: input, shape index: {}]
  %s4 = inlined_call_operand.hbm [shape: bf16[256,128], index: 4, kind: input, shape index: {}]
  %s5 = inlined_call_operand.vmem [shape: f32[1,128], index: 5, kind: input, shape index: {}]
  %s6 = inlined_call_operand.hbm [shape: f32[16,256], index: 6, kind: output, shape index: {0}]
  %s7 = inlined_call_operand.hbm [shape: f32[128,128], index: 7, kind: output, shape index: {1}]
  %s8 = inlined_call_operand.hbm [shape: f32[16,128], index: 8, kind: output, shape index: {2}]
  %9 = xla_tuple %s6, %s7, %s8
  %s10 = sld [smem:[#allocation0]]
  $region85: #{aligned_reid_head.1} parent=0
    _
  %s12 = ssub.s32 1, %s10
  %s13 = scalar_select 0, %s12, %s10
  $region1: #{aligned_reid_head.1} parent=0
    #allocation2 [shape = 'u8[262144]{0}', space=vmem, size = 0x40000, scoped, tag = 'input window, operand 0']
    #allocation3 [shape = 's32[2]{0}', space=sflag, size = 0x8, scoped, tag = 'scoped memory for aligned_reid_head.1']
    #allocation4 [shape = 's32[2]{0}', space=sflag, size = 0x8, scoped, tag = 'scoped memory for aligned_reid_head.1']
    #allocation5 [shape = 'u8[65536]{0}', space=vmem, size = 0x10000, scoped, tag = 'input window, operand 1, single buffered']
    #allocation6 [shape = 's32[1]{0}', space=sflag, size = 0x4, scoped, tag = 'scoped memory for aligned_reid_head.1']
    #allocation7 [shape = 'u8[65536]{0}', space=vmem, size = 0x10000, scoped, tag = 'input window, operand 4, single buffered']
    #allocation8 [shape = 'u8[16384]{0}', space=vmem, size = 0x4000, scoped, tag = 'output window, operand 0']
    #allocation9 [shape = 'u8[65536]{0}', space=vmem, size = 0x10000, scoped, tag = 'output window, operand 1']
    #allocation10 [shape = 's32[2]{0}', space=sflag, size = 0x8, scoped, tag = 'scoped memory for aligned_reid_head.1']
    #allocation11 [shape = 'u8[8192]{0}', space=vmem, size = 0x2000, scoped, tag = 'output window, operand 2']
    %14 = vsyncpa [#allocation3], 0
    %s15 = scalar_lea.sflag [#allocation3], 1
    %16 = vsyncpa %s15, 0
    %17 = vsyncpa [#allocation6], 0
    %18 = vsyncpa [#allocation4], 0
    %s19 = scalar_lea.sflag [#allocation4], 1
    %20 = vsyncpa %s19, 0
    %21 = vsyncpa [#allocation10], 0
    %s22 = scalar_lea.sflag [#allocation10], 1
    %23 = vsyncpa %s22, 0
    loop: start=0, step=1, limit=4
    $region2: #{aligned_reid_head.1} parent=1 // loop_pre_header
      _
    $region3: #{aligned_reid_head.1} parent=1 // loop_header
      %s25 = sphi 0, %s29
      %p26 = scmp.ge.s32.totalorder %s25, 4
      %s35 = sphi 0, %s37
      %s38 = sphi 0, %s35
      %s39 = sphi 0, %s38
      %s55 = sphi 0, %s39
      %s59 = sphi 0, %s59
      %s61 = sphi 0, %s59
      %s62 = sphi 0, %s61
      %s76 = sphi 0, %s62
      %s80 = sphi 0, %s80
      %s82 = sphi 0, %s80
      %s83 = sphi 0, %s82
      %s97 = sphi 0, %s83
      %s101 = sphi 0, %s101
      %s103 = sphi 0, %s101
      %s104 = sphi 0, %s103
      %s118 = sphi 0, %s104
      %s122 = sphi 0, %s122
      %s124 = sphi 0, %s122
      %s125 = sphi 0, %s124
      %s139 = sphi 0, %s125
      %s143 = sphi 0, %s143
      %s145 = sphi 0, %s143
      %s146 = sphi 0, %s145
      %s160 = sphi 0, %s146
      %s166 = sphi 0, %s168
      %s169 = sphi 0, %s166
      %s170 = sphi 0, %s169
      %s186 = sphi 0, %s170
      %s192 = sphi 0, %s194
      %s195 = sphi 0, %s192
      %s196 = sphi 0, %s195
      %s212 = sphi 0, %s196
      %s218 = sphi 0, %s220
      %s221 = sphi 0, %s218
      %s222 = sphi 0, %s221
      %s238 = sphi 0, %s222
    $region4: #{aligned_reid_head.1} parent=1 // loop_header_branch
      %28 = sbr.rel (%p26) target = $region8
    $region5: #{aligned_reid_head.1} parent=1 // loop_body
      %s30 = ssub.s32 %s25, 1
      %s31 = ssub.s32 %s25, 2
      %s32 = sadd.s32 %s25, 1
      %s33 = ssub.s32 %s25, %s32
      %p34 = scmp.eq.s32.totalorder %s33, 0
      %s36 = sadd.s32 %s35, 1
      %s37 = scalar_select %p34, %s35, %s36
      %p40 = pneg %p34
      %p41 = scmp.eq.s32.totalorder %s25, 1
      %p42 = por %p40, %p41
      %p43 = scmp.ne.s32.totalorder %s35, %s38
      %p44 = scmp.eq.s32.totalorder %s25, 0
      %p45 = por %p43, %p44
      %p46 = scmp.ne.s32.totalorder %s35, %s38
      %p47 = scmp.eq.s32.totalorder %s30, 1
      %p48 = por %p46, %p47
      %p49 = scmp.ne.s32.totalorder %s38, %s39
      %p50 = scmp.eq.s32.totalorder %s30, 0
      %p51 = por %p49, %p50
      %p52 = scmp.ne.s32.totalorder %s38, %s39
      %p53 = scmp.eq.s32.totalorder %s31, 1
      %p54 = por %p52, %p53
      %p56 = scmp.ne.s32.totalorder %s39, %s55
      %p57 = scmp.eq.s32.totalorder %s31, 0
      %p58 = por %p56, %p57
      %s60 = sadd.s32 %s59, 1
      %p63 = scmp.eq.s32.totalorder %s25, 1
      %p64 = scmp.ne.s32.totalorder %s59, %s61
      %p65 = scmp.eq.s32.totalorder %s25, 0
      %p66 = por %p64, %p65
      %p67 = scmp.ne.s32.totalorder %s59, %s61
      %p68 = scmp.eq.s32.totalorder %s30, 1
      %p69 = por %p67, %p68
      %p70 = scmp.ne.s32.totalorder %s61, %s62
      %p71 = scmp.eq.s32.totalorder %s30, 0
      %p72 = por %p70, %p71
      %p73 = scmp.ne.s32.totalorder %s61, %s62
      %p74 = scmp.eq.s32.totalorder %s31, 1
      %p75 = por %p73, %p74
      %p77 = scmp.ne.s32.totalorder %s62, %s76
      %p78 = scmp.eq.s32.totalorder %s31, 0
      %p79 = por %p77, %p78
      %s81 = sadd.s32 %s80, 1
      %p84 = scmp.eq.s32.totalorder %s25, 1
      %p85 = scmp.ne.s32.totalorder %s80, %s82
      %p86 = scmp.eq.s32.totalorder %s25, 0
      %p87 = por %p85, %p86
      %p88 = scmp.ne.s32.totalorder %s80, %s82
      %p89 = scmp.eq.s32.totalorder %s30, 1
      %p90 = por %p88, %p89
      %p91 = scmp.ne.s32.totalorder %s82, %s83
      %p92 = scmp.eq.s32.totalorder %s30, 0
      %p93 = por %p91, %p92
      %p94 = scmp.ne.s32.totalorder %s82, %s83
      %p95 = scmp.eq.s32.totalorder %s31, 1
      %p96 = por %p94, %p95
      %p98 = scmp.ne.s32.totalorder %s83, %s97
      %p99 = scmp.eq.s32.totalorder %s31, 0
      %p100 = por %p98, %p99
      %s102 = sadd.s32 %s101, 1
      %p105 = scmp.eq.s32.totalorder %s25, 1
      %p106 = scmp.ne.s32.totalorder %s101, %s103
      %p107 = scmp.eq.s32.totalorder %s25, 0
      %p108 = por %p106, %p107
      %p109 = scmp.ne.s32.totalorder %s101, %s103
      %p110 = scmp.eq.s32.totalorder %s30, 1
      %p111 = por %p109, %p110
      %p112 = scmp.ne.s32.totalorder %s103, %s104
      %p113 = scmp.eq.s32.totalorder %s30, 0
      %p114 = por %p112, %p113
      %p115 = scmp.ne.s32.totalorder %s103, %s104
      %p116 = scmp.eq.s32.totalorder %s31, 1
      %p117 = por %p115, %p116
      %p119 = scmp.ne.s32.totalorder %s104, %s118
      %p120 = scmp.eq.s32.totalorder %s31, 0
      %p121 = por %p119, %p120
      %s123 = sadd.s32 %s122, 1
      %p126 = scmp.eq.s32.totalorder %s25, 1
      %p127 = scmp.ne.s32.totalorder %s122, %s124
      %p128 = scmp.eq.s32.totalorder %s25, 0
      %p129 = por %p127, %p128
      %p130 = scmp.ne.s32.totalorder %s122, %s124
      %p131 = scmp.eq.s32.totalorder %s30, 1
      %p132 = por %p130, %p131
      %p133 = scmp.ne.s32.totalorder %s124, %s125
      %p134 = scmp.eq.s32.totalorder %s30, 0
      %p135 = por %p133, %p134
      %p136 = scmp.ne.s32.totalorder %s124, %s125
      %p137 = scmp.eq.s32.totalorder %s31, 1
      %p138 = por %p136, %p137
      %p140 = scmp.ne.s32.totalorder %s125, %s139
      %p141 = scmp.eq.s32.totalorder %s31, 0
      %p142 = por %p140, %p141
      %s144 = sadd.s32 %s143, 1
      %p147 = scmp.eq.s32.totalorder %s25, 1
      %p148 = scmp.ne.s32.totalorder %s143, %s145
      %p149 = scmp.eq.s32.totalorder %s25, 0
      %p150 = por %p148, %p149
      %p151 = scmp.ne.s32.totalorder %s143, %s145
      %p152 = scmp.eq.s32.totalorder %s30, 1
      %p153 = por %p151, %p152
      %p154 = scmp.ne.s32.totalorder %s145, %s146
      %p155 = scmp.eq.s32.totalorder %s30, 0
      %p156 = por %p154, %p155
      %p157 = scmp.ne.s32.totalorder %s145, %s146
      %p158 = scmp.eq.s32.totalorder %s31, 1
      %p159 = por %p157, %p158
      %p161 = scmp.ne.s32.totalorder %s146, %s160
      %p162 = scmp.eq.s32.totalorder %s31, 0
      %p163 = por %p161, %p162
      %s164 = ssub.s32 %s25, %s32
      %p165 = scmp.eq.s32.totalorder %s164, 0
      %s167 = sadd.s32 %s166, 1
      %s168 = scalar_select %p165, %s166, %s167
      %p171 = pneg %p165
      %p172 = scmp.eq.s32.totalorder %s25, 1
      %p173 = por %p171, %p172
      %p174 = scmp.ne.s32.totalorder %s166, %s169
      %p175 = scmp.eq.s32.totalorder %s25, 0
      %p176 = por %p174, %p175
      %p177 = scmp.ne.s32.totalorder %s166, %s169
      %p178 = scmp.eq.s32.totalorder %s30, 1
      %p179 = por %p177, %p178
      %p180 = scmp.ne.s32.totalorder %s169, %s170
      %p181 = scmp.eq.s32.totalorder %s30, 0
      %p182 = por %p180, %p181
      %p183 = scmp.ne.s32.totalorder %s169, %s170
      %p184 = scmp.eq.s32.totalorder %s31, 1
      %p185 = por %p183, %p184
      %p187 = scmp.ne.s32.totalorder %s170, %s186
      %p188 = scmp.eq.s32.totalorder %s31, 0
      %p189 = por %p187, %p188
      %s190 = ssub.s32 %s25, %s32
      %p191 = scmp.eq.s32.totalorder %s190, 0
      %s193 = sadd.s32 %s192, 1
      %s194 = scalar_select %p191, %s192, %s193
      %p197 = pneg %p191
      %p198 = scmp.eq.s32.totalorder %s25, 1
      %p199 = por %p197, %p198
      %p200 = scmp.ne.s32.totalorder %s192, %s195
      %p201 = scmp.eq.s32.totalorder %s25, 0
      %p202 = por %p200, %p201
      %p203 = scmp.ne.s32.totalorder %s192, %s195
      %p204 = scmp.eq.s32.totalorder %s30, 1
      %p205 = por %p203, %p204
      %p206 = scmp.ne.s32.totalorder %s195, %s196
      %p207 = scmp.eq.s32.totalorder %s30, 0
      %p208 = por %p206, %p207
      %p209 = scmp.ne.s32.totalorder %s195, %s196
      %p210 = scmp.eq.s32.totalorder %s31, 1
      %p211 = por %p209, %p210
      %p213 = scmp.ne.s32.totalorder %s196, %s212
      %p214 = scmp.eq.s32.totalorder %s31, 0
      %p215 = por %p213, %p214
      %s216 = ssub.s32 %s25, %s32
      %p217 = scmp.eq.s32.totalorder %s216, 0
      %s219 = sadd.s32 %s218, 1
      %s220 = scalar_select %p217, %s218, %s219
      %p223 = pneg %p217
      %p224 = scmp.eq.s32.totalorder %s25, 1
      %p225 = por %p223, %p224
      %p226 = scmp.ne.s32.totalorder %s218, %s221
      %p227 = scmp.eq.s32.totalorder %s25, 0
      %p228 = por %p226, %p227
      %p229 = scmp.ne.s32.totalorder %s218, %s221
      %p230 = scmp.eq.s32.totalorder %s30, 1
      %p231 = por %p229, %p230
      %p232 = scmp.ne.s32.totalorder %s221, %s222
      %p233 = scmp.eq.s32.totalorder %s30, 0
      %p234 = por %p232, %p233
      %p235 = scmp.ne.s32.totalorder %s221, %s222
      %p236 = scmp.eq.s32.totalorder %s31, 1
      %p237 = por %p235, %p236
      %p239 = scmp.ne.s32.totalorder %s222, %s238
      %p240 = scmp.eq.s32.totalorder %s31, 0
      %p241 = por %p239, %p240
      %p242 = scmp.le.s32.totalorder 1, %s25
      %p243 = scmp.lt.s32.totalorder %s25, 3
      %p244 = pnand %p242, %p243
      %p245 = pneg %p244
      // Predicated region
      $region9: #{aligned_reid_head.1} parent=5 // pred_check
        _
      $region10: #{aligned_reid_head.1} parent=5 // pred_check_branch
        %247 = sbr.rel (%p244) target = $region12
      $region11: #{aligned_reid_head.1} parent=5 // pred_region
        %s248 = ssub.s32 %s25, 1
        // Predicated region
        $region13: #{aligned_reid_head.1} parent=11 // pred_check
          %p249 = pneg %p72
        $region14: #{aligned_reid_head.1} parent=11 // pred_check_branch
          %251 = sbr.rel (%p249) target = $region16
        $region15: #{aligned_reid_head.1} parent=11 // pred_region
          %s253 = ssub.s32 2048, 2048
          %254 = vsyncadd [#allocation6], %s253
          %s255 = sshll.u32 [#allocation5], 4
          %s256 = int_to_ptr.vmem [resolvable:$true] %s255
          %261 = dma.hbm_to_vmem [thread:$0]  %s1, 2048, %s256, [#allocation6], 64, 64, 4
        $region16: #{aligned_reid_head.1} parent=11 // pred_fallthru
          _
        // Predicated region
        $region17: #{aligned_reid_head.1} parent=11 // pred_check
          %p262 = pneg %p93
        $region18: #{aligned_reid_head.1} parent=11 // pred_check_branch
          %264 = sbr.rel (%p262) target = $region20
        $region19: #{aligned_reid_head.1} parent=11 // pred_region
          _
        $region20: #{aligned_reid_head.1} parent=11 // pred_fallthru
          _
        // Predicated region
        $region21: #{aligned_reid_head.1} parent=11 // pred_check
          %p265 = pneg %p114
        $region22: #{aligned_reid_head.1} parent=11 // pred_check_branch
          %267 = sbr.rel (%p265) target = $region24
        $region23: #{aligned_reid_head.1} parent=11 // pred_region
          _
        $region24: #{aligned_reid_head.1} parent=11 // pred_fallthru
          _
        // Predicated region
        $region25: #{aligned_reid_head.1} parent=11 // pred_check
          %p268 = pneg %p135
        $region26: #{aligned_reid_head.1} parent=11 // pred_check_branch
          %270 = sbr.rel (%p268) target = $region28
        $region27: #{aligned_reid_head.1} parent=11 // pred_region
          %s272 = ssub.s32 2048, 2048
          %273 = vsyncadd [#allocation6], %s272
          %s274 = sshll.u32 [#allocation7], 4
          %s275 = int_to_ptr.vmem [resolvable:$true] %s274
          %280 = dma.hbm_to_vmem [thread:$0]  %s4, 2048, %s275, [#allocation6], 64, 64, 4
        $region28: #{aligned_reid_head.1} parent=11 // pred_fallthru
          _
        // Predicated region
        $region29: #{aligned_reid_head.1} parent=11 // pred_check
          %p281 = pneg %p156
        $region30: #{aligned_reid_head.1} parent=11 // pred_check_branch
          %283 = sbr.rel (%p281) target = $region32
        $region31: #{aligned_reid_head.1} parent=11 // pred_region
          _
        $region32: #{aligned_reid_head.1} parent=11 // pred_fallthru
          _
      $region12: #{aligned_reid_head.1} parent=5 // pred_fallthru
        _
      %p284 = scmp.lt.s32.totalorder %s25, 2
      // Predicated region
      $region33: #{aligned_reid_head.1} parent=5 // pred_check
        %p285 = pneg %p284
      $region34: #{aligned_reid_head.1} parent=5 // pred_check_branch
        %287 = sbr.rel (%p285) target = $region36
      $region35: #{aligned_reid_head.1} parent=5 // pred_region
        // Predicated region
        $region37: #{aligned_reid_head.1} parent=35 // pred_check
          %p288 = pneg %p45
        $region38: #{aligned_reid_head.1} parent=35 // pred_check_branch
          %290 = sbr.rel (%p288) target = $region40
        $region39: #{aligned_reid_head.1} parent=35 // pred_region
          %s291 = sand.u32 %s35, 1
          %s292 = scalar_lea.sflag [#allocation3], %s291
          %s293 = sand.u32 %s35, 1
          %s294 = smul.addr %s293, 256
          %s295 = scalar_lea.vmem [#allocation2], %s294
          %s296 = smul.u32 8, %s25
          %s298 = ssub.s32 4096, 4096
          %299 = vsyncadd %s292, %s298
          %s300 = smul.addr %s296, 8
          %s301 = smul.addr %s300, 64
          %s302 = scalar_lea.hbm %s0, %s301
          %s303 = sshll.u32 %s295, 4
          %s304 = int_to_ptr.vmem [resolvable:$true] %s303
          %309 = dma.hbm_to_vmem [thread:$0]  %s302, 4096, %s304, %s292, 128, 128, 8
        $region40: #{aligned_reid_head.1} parent=35 // pred_fallthru
          _
      $region36: #{aligned_reid_head.1} parent=5 // pred_fallthru
        _
      %p310 = scmp.le.s32.totalorder 1, %s25
      %p311 = scmp.lt.s32.totalorder %s25, 3
      %p312 = pnand %p310, %p311
      %p313 = pneg %p312
      // Predicated region
      $region41: #{aligned_reid_head.1} parent=5 // pred_check
        _
      $region42: #{aligned_reid_head.1} parent=5 // pred_check_branch
        %315 = sbr.rel (%p312) target = $region44
      $region43: #{aligned_reid_head.1} parent=5 // pred_region
        %s316 = ssub.s32 %s25, 1
        %s317 = sand.u32 %s38, 1
        %s318 = scalar_lea.sflag [#allocation3], %s317
        %s319 = sand.u32 %s38, 1
        %s320 = smul.addr %s319, 256
        %s321 = scalar_lea.vmem [#allocation2], %s320
        // Predicated region
        $region45: #{aligned_reid_head.1} parent=43 // pred_check
          %p322 = pneg %p51
        $region46: #{aligned_reid_head.1} parent=43 // pred_check_branch
          %324 = sbr.rel (%p322) target = $region48
        $region47: #{aligned_reid_head.1} parent=43 // pred_region
          %325 = dma.done %s318, 4096
        $region48: #{aligned_reid_head.1} parent=43 // pred_fallthru
          _
        // Predicated region
        $region49: #{aligned_reid_head.1} parent=43 // pred_check
          %p326 = pneg %p72
        $region50: #{aligned_reid_head.1} parent=43 // pred_check_branch
          %328 = sbr.rel (%p326) target = $region52
        $region51: #{aligned_reid_head.1} parent=43 // pred_region
          %329 = dma.done [#allocation6], 2048
        $region52: #{aligned_reid_head.1} parent=43 // pred_fallthru
          _
        // Predicated region
        $region53: #{aligned_reid_head.1} parent=43 // pred_check
          %p330 = pneg %p135
        $region54: #{aligned_reid_head.1} parent=43 // pred_check_branch
          %332 = sbr.rel (%p330) target = $region56
        $region55: #{aligned_reid_head.1} parent=43 // pred_region
          %333 = dma.done [#allocation6], 2048
        $region56: #{aligned_reid_head.1} parent=43 // pred_fallthru
          _
        %s334 = sand.u32 %s38, 1
        %s335 = scalar_lea.sflag [#allocation3], %s334
        %s336 = sand.u32 %s38, 1
        %s337 = smul.addr %s336, 256
        %s338 = scalar_lea.vmem [#allocation2], %s337
        %p339 = pneg %p51
        %p340 = pneg %p48
        %p341 = pneg %p72
        %p342 = pneg %p69
        %p343 = pneg %p93
        %p344 = pneg %p90
        %p345 = pneg %p114
        %p346 = pneg %p111
        %p347 = pneg %p135
        %p348 = pneg %p132
        %p349 = pneg %p156
        %p350 = pneg %p153
        %p351 = pneg %p182
        %p352 = pneg %p179
        %s353 = sand.u32 %s169, 1
        %s354 = scalar_lea.sflag [#allocation4], %s353
        %s355 = sand.u32 %s169, 1
        %s356 = smul.addr %s355, 16
        %s357 = scalar_lea.vmem [#allocation8], %s356
        %p358 = pneg %p208
        %p359 = pneg %p205
        %s360 = sand.u32 %s30, 1
        %s361 = scalar_lea.sflag [#allocation10], %s360
        %s362 = sand.u32 %s195, 1
        %s363 = smul.addr %s362, 64
        %s364 = scalar_lea.vmem [#allocation9], %s363
        %p365 = pneg %p234
        %p366 = pneg %p231
        %s367 = sand.u32 %s30, 1
        %s368 = scalar_lea.sflag [#allocation10], %s367
        %s369 = sand.u32 %s221, 1
        %s370 = smul.addr %s369, 8
        %s371 = scalar_lea.vmem [#allocation11], %s370
        %s372 = smul.u32 8, %s30
        %s373 = smul.u32 8, %s30
        %v375 = vld [vmem:[%s321] sm:$0xff]
        %v376 = vld [vmem:[%s321 + $0x20] sm:$0xff]
        %v377 = vld [vmem:[%s321 + $0x40] sm:$0xff]
        %v378 = vld [vmem:[%s321 + $0x60] sm:$0xff]
        %v379 = vld [vmem:[%s321 + $0x80] sm:$0xff]
        %v380 = vld [vmem:[%s321 + $0xa0] sm:$0xff]
        %v381 = vld [vmem:[%s321 + $0xc0] sm:$0xff]
        %v382 = vld [vmem:[%s321 + $0xe0] sm:$0xff]
        %v383 = vunpack.c.l.bf16 %v375
        %v384 = vunpack.c.h.bf16 %v375
        %v385 = vunpack.c.l.bf16 %v376
        %v386 = vunpack.c.h.bf16 %v376
        %v387 = vunpack.c.l.bf16 %v377
        %v388 = vunpack.c.h.bf16 %v377
        %v389 = vunpack.c.l.bf16 %v378
        %v390 = vunpack.c.h.bf16 %v378
        %v391 = vunpack.c.l.bf16 %v379
        %v392 = vunpack.c.h.bf16 %v379
        %v393 = vunpack.c.l.bf16 %v380
        %v394 = vunpack.c.h.bf16 %v380
        %v395 = vunpack.c.l.bf16 %v381
        %v396 = vunpack.c.h.bf16 %v381
        %v397 = vunpack.c.l.bf16 %v382
        %v398 = vunpack.c.h.bf16 %v382
        %s399 = scalar_lea.vmem %s321, 8 [#allocation2]
        %v400 = vld [vmem:[%s399] sm:$0xff]
        %v401 = vld [vmem:[%s399 + $0x20] sm:$0xff]
        %v402 = vld [vmem:[%s399 + $0x40] sm:$0xff]
        %v403 = vld [vmem:[%s399 + $0x60] sm:$0xff]
        %v404 = vld [vmem:[%s399 + $0x80] sm:$0xff]
        %v405 = vld [vmem:[%s399 + $0xa0] sm:$0xff]
        %v406 = vld [vmem:[%s399 + $0xc0] sm:$0xff]
        %v407 = vld [vmem:[%s399 + $0xe0] sm:$0xff]
        %v408 = vunpack.c.l.bf16 %v400
        %v409 = vunpack.c.h.bf16 %v400
        %v410 = vunpack.c.l.bf16 %v401
        %v411 = vunpack.c.h.bf16 %v401
        %v412 = vunpack.c.l.bf16 %v402
        %v413 = vunpack.c.h.bf16 %v402
        %v414 = vunpack.c.l.bf16 %v403
        %v415 = vunpack.c.h.bf16 %v403
        %v416 = vunpack.c.l.bf16 %v404
        %v417 = vunpack.c.h.bf16 %v404
        %v418 = vunpack.c.l.bf16 %v405
        %v419 = vunpack.c.h.bf16 %v405
        %v420 = vunpack.c.l.bf16 %v406
        %v421 = vunpack.c.h.bf16 %v406
        %v422 = vunpack.c.l.bf16 %v407
        %v423 = vunpack.c.h.bf16 %v407
        %v424 = vadd.f32 %v383, %v408
        %v425 = vadd.f32 %v384, %v409
        %v426 = vadd.f32 %v385, %v410
        %v427 = vadd.f32 %v386, %v411
        %v428 = vadd.f32 %v387, %v412
        %v429 = vadd.f32 %v388, %v413
        %v430 = vadd.f32 %v389, %v414
        %v431 = vadd.f32 %v390, %v415
        %v432 = vadd.f32 %v391, %v416
        %v433 = vadd.f32 %v392, %v417
        %v434 = vadd.f32 %v393, %v418
        %v435 = vadd.f32 %v394, %v419
        %v436 = vadd.f32 %v395, %v420
        %v437 = vadd.f32 %v396, %v421
        %v438 = vadd.f32 %v397, %v422
        %v439 = vadd.f32 %v398, %v423
        %s440 = scalar_lea.vmem %s321, 16 [#allocation2]
        %v441 = vld [vmem:[%s440] sm:$0xff]
        %v442 = vld [vmem:[%s440 + $0x20] sm:$0xff]
        %v443 = vld [vmem:[%s440 + $0x40] sm:$0xff]
        %v444 = vld [vmem:[%s440 + $0x60] sm:$0xff]
        %v445 = vld [vmem:[%s440 + $0x80] sm:$0xff]
        %v446 = vld [vmem:[%s440 + $0xa0] sm:$0xff]
        %v447 = vld [vmem:[%s440 + $0xc0] sm:$0xff]
        %v448 = vld [vmem:[%s440 + $0xe0] sm:$0xff]
        %v449 = vunpack.c.l.bf16 %v441
        %v450 = vunpack.c.h.bf16 %v441
        %v451 = vunpack.c.l.bf16 %v442
        %v452 = vunpack.c.h.bf16 %v442
        %v453 = vunpack.c.l.bf16 %v443
        %v454 = vunpack.c.h.bf16 %v443
        %v455 = vunpack.c.l.bf16 %v444
        %v456 = vunpack.c.h.bf16 %v444
        %v457 = vunpack.c.l.bf16 %v445
        %v458 = vunpack.c.h.bf16 %v445
        %v459 = vunpack.c.l.bf16 %v446
        %v460 = vunpack.c.h.bf16 %v446
        %v461 = vunpack.c.l.bf16 %v447
        %v462 = vunpack.c.h.bf16 %v447
        %v463 = vunpack.c.l.bf16 %v448
        %v464 = vunpack.c.h.bf16 %v448
        %v465 = vadd.f32 %v424, %v449
        %v466 = vadd.f32 %v425, %v450
        %v467 = vadd.f32 %v426, %v451
        %v468 = vadd.f32 %v427, %v452
        %v469 = vadd.f32 %v428, %v453
        %v470 = vadd.f32 %v429, %v454
        %v471 = vadd.f32 %v430, %v455
        %v472 = vadd.f32 %v431, %v456
        %v473 = vadd.f32 %v432, %v457
        %v474 = vadd.f32 %v433, %v458
        %v475 = vadd.f32 %v434, %v459
        %v476 = vadd.f32 %v435, %v460
        %v477 = vadd.f32 %v436, %v461
        %v478 = vadd.f32 %v437, %v462
        %v479 = vadd.f32 %v438, %v463
        %v480 = vadd.f32 %v439, %v464
        %s481 = scalar_lea.vmem %s321, 24 [#allocation2]
        %v482 = vld [vmem:[%s481] sm:$0xff]
        %v483 = vld [vmem:[%s481 + $0x20] sm:$0xff]
        %v484 = vld [vmem:[%s481 + $0x40] sm:$0xff]
        %v485 = vld [vmem:[%s481 + $0x60] sm:$0xff]
        %v486 = vld [vmem:[%s481 + $0x80] sm:$0xff]
        %v487 = vld [vmem:[%s481 + $0xa0] sm:$0xff]
        %v488 = vld [vmem:[%s481 + $0xc0] sm:$0xff]
        %v489 = vld [vmem:[%s481 + $0xe0] sm:$0xff]
        %v490 = vunpack.c.l.bf16 %v482
        %v491 = vunpack.c.h.bf16 %v482
        %v492 = vunpack.c.l.bf16 %v483
        %v493 = vunpack.c.h.bf16 %v483
        %v494 = vunpack.c.l.bf16 %v484
        %v495 = vunpack.c.h.bf16 %v484
        %v496 = vunpack.c.l.bf16 %v485
        %v497 = vunpack.c.h.bf16 %v485
        %v498 = vunpack.c.l.bf16 %v486
        %v499 = vunpack.c.h.bf16 %v486
        %v500 = vunpack.c.l.bf16 %v487
        %v501 = vunpack.c.h.bf16 %v487
        %v502 = vunpack.c.l.bf16 %v488
        %v503 = vunpack.c.h.bf16 %v488
        %v504 = vunpack.c.l.bf16 %v489
        %v505 = vunpack.c.h.bf16 %v489
        %v506 = vadd.f32 %v465, %v490
        %v507 = vadd.f32 %v466, %v491
        %v508 = vadd.f32 %v467, %v492
        %v509 = vadd.f32 %v468, %v493
        %v510 = vadd.f32 %v469, %v494
        %v511 = vadd.f32 %v470, %v495
        %v512 = vadd.f32 %v471, %v496
        %v513 = vadd.f32 %v472, %v497
        %v514 = vadd.f32 %v473, %v498
        %v515 = vadd.f32 %v474, %v499
        %v516 = vadd.f32 %v475, %v500
        %v517 = vadd.f32 %v476, %v501
        %v518 = vadd.f32 %v477, %v502
        %v519 = vadd.f32 %v478, %v503
        %v520 = vadd.f32 %v479, %v504
        %v521 = vadd.f32 %v480, %v505
        %v522 = vmul.f32 %v506, 0.25
        %v523 = vmul.f32 %v507, 0.25
        %v524 = vmul.f32 %v508, 0.25
        %v525 = vmul.f32 %v509, 0.25
        %v526 = vmul.f32 %v510, 0.25
        %v527 = vmul.f32 %v511, 0.25
        %v528 = vmul.f32 %v512, 0.25
        %v529 = vmul.f32 %v513, 0.25
        %v530 = vmul.f32 %v514, 0.25
        %v531 = vmul.f32 %v515, 0.25
        %v532 = vmul.f32 %v516, 0.25
        %v533 = vmul.f32 %v517, 0.25
        %v534 = vmul.f32 %v518, 0.25
        %v535 = vmul.f32 %v519, 0.25
        %v536 = vmul.f32 %v520, 0.25
        %v537 = vmul.f32 %v521, 0.25
        %v538 = vrot.slane %v522, 4
        %v539 = vadd.f32 %v522, %v538
        %v540 = vrot.slane %v539, 2
        %v541 = vadd.f32 %v539, %v540
        %v542 = vrot.slane %v541, 1
        %v543 = vadd.f32 %v541, %v542
        %v544 = vrot.slane %v523, 4
        %v545 = vadd.f32 %v523, %v544
        %v546 = vrot.slane %v545, 2
        %v547 = vadd.f32 %v545, %v546
        %v548 = vrot.slane %v547, 1
        %v549 = vadd.f32 %v547, %v548
        %v550 = vrot.slane %v524, 4
        %v551 = vadd.f32 %v524, %v550
        %v552 = vrot.slane %v551, 2
        %v553 = vadd.f32 %v551, %v552
        %v554 = vrot.slane %v553, 1
        %v555 = vadd.f32 %v553, %v554
        %v556 = vrot.slane %v525, 4
        %v557 = vadd.f32 %v525, %v556
        %v558 = vrot.slane %v557, 2
        %v559 = vadd.f32 %v557, %v558
        %v560 = vrot.slane %v559, 1
        %v561 = vadd.f32 %v559, %v560
        %v562 = vrot.slane %v526, 4
        %v563 = vadd.f32 %v526, %v562
        %v564 = vrot.slane %v563, 2
        %v565 = vadd.f32 %v563, %v564
        %v566 = vrot.slane %v565, 1
        %v567 = vadd.f32 %v565, %v566
        %v568 = vrot.slane %v527, 4
        %v569 = vadd.f32 %v527, %v568
        %v570 = vrot.slane %v569, 2
        %v571 = vadd.f32 %v569, %v570
        %v572 = vrot.slane %v571, 1
        %v573 = vadd.f32 %v571, %v572
        %v574 = vrot.slane %v528, 4
        %v575 = vadd.f32 %v528, %v574
        %v576 = vrot.slane %v575, 2
        %v577 = vadd.f32 %v575, %v576
        %v578 = vrot.slane %v577, 1
        %v579 = vadd.f32 %v577, %v578
        %v580 = vrot.slane %v529, 4
        %v581 = vadd.f32 %v529, %v580
        %v582 = vrot.slane %v581, 2
        %v583 = vadd.f32 %v581, %v582
        %v584 = vrot.slane %v583, 1
        %v585 = vadd.f32 %v583, %v584
        %v586 = vrot.slane %v530, 4
        %v587 = vadd.f32 %v530, %v586
        %v588 = vrot.slane %v587, 2
        %v589 = vadd.f32 %v587, %v588
        %v590 = vrot.slane %v589, 1
        %v591 = vadd.f32 %v589, %v590
        %v592 = vrot.slane %v531, 4
        %v593 = vadd.f32 %v531, %v592
        %v594 = vrot.slane %v593, 2
        %v595 = vadd.f32 %v593, %v594
        %v596 = vrot.slane %v595, 1
        %v597 = vadd.f32 %v595, %v596
        %v598 = vrot.slane %v532, 4
        %v599 = vadd.f32 %v532, %v598
        %v600 = vrot.slane %v599, 2
        %v601 = vadd.f32 %v599, %v600
        %v602 = vrot.slane %v601, 1
        %v603 = vadd.f32 %v601, %v602
        %v604 = vrot.slane %v533, 4
        %v605 = vadd.f32 %v533, %v604
        %v606 = vrot.slane %v605, 2
        %v607 = vadd.f32 %v605, %v606
        %v608 = vrot.slane %v607, 1
        %v609 = vadd.f32 %v607, %v608
        %v610 = vrot.slane %v534, 4
        %v611 = vadd.f32 %v534, %v610
        %v612 = vrot.slane %v611, 2
        %v613 = vadd.f32 %v611, %v612
        %v614 = vrot.slane %v613, 1
        %v615 = vadd.f32 %v613, %v614
        %v616 = vrot.slane %v535, 4
        %v617 = vadd.f32 %v535, %v616
        %v618 = vrot.slane %v617, 2
        %v619 = vadd.f32 %v617, %v618
        %v620 = vrot.slane %v619, 1
        %v621 = vadd.f32 %v619, %v620
        %v622 = vrot.slane %v536, 4
        %v623 = vadd.f32 %v536, %v622
        %v624 = vrot.slane %v623, 2
        %v625 = vadd.f32 %v623, %v624
        %v626 = vrot.slane %v625, 1
        %v627 = vadd.f32 %v625, %v626
        %v628 = vrot.slane %v537, 4
        %v629 = vadd.f32 %v537, %v628
        %v630 = vrot.slane %v629, 2
        %v631 = vadd.f32 %v629, %v630
        %v632 = vrot.slane %v631, 1
        %v633 = vadd.f32 %v631, %v632
        %v634 = vrcp.pop 8.0
        %v635 = vmul.f32 %v543, %v634
        %v636 = vmul.f32 %v549, %v634
        %v637 = vmul.f32 %v555, %v634
        %v638 = vmul.f32 %v561, %v634
        %v639 = vmul.f32 %v567, %v634
        %v640 = vmul.f32 %v573, %v634
        %v641 = vmul.f32 %v579, %v634
        %v642 = vmul.f32 %v585, %v634
        %v643 = vmul.f32 %v591, %v634
        %v644 = vmul.f32 %v597, %v634
        %v645 = vmul.f32 %v603, %v634
        %v646 = vmul.f32 %v609, %v634
        %v647 = vmul.f32 %v615, %v634
        %v648 = vmul.f32 %v621, %v634
        %v649 = vmul.f32 %v627, %v634
        %v650 = vmul.f32 %v633, %v634
        %vm667 = vcmask 1041409
        %v668 = vsel %vm667, %v637, %v635
        %vm669 = vcmask 1042434
        %v670 = vsel %vm669, %v639, %v668
        %vm671 = vcmask 1043459
        %v672 = vsel %vm671, %v641, %v670
        %vm673 = vcmask 1044484
        %v674 = vsel %vm673, %v643, %v672
        %vm675 = vcmask 1045509
        %v676 = vsel %vm675, %v645, %v674
        %vm677 = vcmask 1046534
        %v678 = vsel %vm677, %v647, %v676
        %vm679 = vcmask 1047559
        %v680 = vsel %vm679, %v649, %v678
        %v681 = vsel %vm667, %v638, %v636
        %v682 = vsel %vm669, %v640, %v681
        %v683 = vsel %vm671, %v642, %v682
        %v684 = vsel %vm673, %v644, %v683
        %v685 = vsel %vm675, %v646, %v684
        %v686 = vsel %vm677, %v648, %v685
        %v687 = vsel %vm679, %v650, %v686
        %690 = vst [vmem:[%s357] sm:$0xff] %v680
        %691 = vst [vmem:[%s357 + $0x8] sm:$0xff] %v687
        %v692 = vpack.c.bf16 %v524, %v522
        %v693 = vpack.c.bf16 %v525, %v523
        %v694 = vpack.c.bf16 %v528, %v526
        %v695 = vpack.c.bf16 %v529, %v527
        %v696 = vpack.c.bf16 %v532, %v530
        %v697 = vpack.c.bf16 %v533, %v531
        %v698 = vpack.c.bf16 %v536, %v534
        %v699 = vpack.c.bf16 %v537, %v535
        %v700 = vld [vmem:[#allocation5] sm:$0xf]
        %v701 = vld [vmem:[#allocation5 + $0x4] sm:$0xf]
        %v702 = vld [vmem:[#allocation5 + $0x8] sm:$0xf]
        %v703 = vld [vmem:[#allocation5 + $0xc] sm:$0xf]
        %v704 = vld [vmem:[#allocation5 + $0x10] sm:$0xf]
        %v705 = vld [vmem:[#allocation5 + $0x14] sm:$0xf]
        %v706 = vld [vmem:[#allocation5 + $0x18] sm:$0xf]
        %v707 = vld [vmem:[#allocation5 + $0x1c] sm:$0xf]
        %v708 = vld [vmem:[#allocation5 + $0x20] sm:$0xf]
        %v709 = vld [vmem:[#allocation5 + $0x24] sm:$0xf]
        %v710 = vld [vmem:[#allocation5 + $0x28] sm:$0xf]
        %v711 = vld [vmem:[#allocation5 + $0x2c] sm:$0xf]
        %v712 = vld [vmem:[#allocation5 + $0x30] sm:$0xf]
        %v713 = vld [vmem:[#allocation5 + $0x34] sm:$0xf]
        %v714 = vld [vmem:[#allocation5 + $0x38] sm:$0xf]
        %v715 = vld [vmem:[#allocation5 + $0x3c] sm:$0xf]
        %v716 = vld [vmem:[#allocation5 + $0x40] sm:$0xf]
        %v717 = vld [vmem:[#allocation5 + $0x44] sm:$0xf]
        %v718 = vld [vmem:[#allocation5 + $0x48] sm:$0xf]
        %v719 = vld [vmem:[#allocation5 + $0x4c] sm:$0xf]
        %v720 = vld [vmem:[#allocation5 + $0x50] sm:$0xf]
        %v721 = vld [vmem:[#allocation5 + $0x54] sm:$0xf]
        %v722 = vld [vmem:[#allocation5 + $0x58] sm:$0xf]
        %v723 = vld [vmem:[#allocation5 + $0x5c] sm:$0xf]
        %v724 = vld [vmem:[#allocation5 + $0x60] sm:$0xf]
        %v725 = vld [vmem:[#allocation5 + $0x64] sm:$0xf]
        %v726 = vld [vmem:[#allocation5 + $0x68] sm:$0xf]
        %v727 = vld [vmem:[#allocation5 + $0x6c] sm:$0xf]
        %v728 = vld [vmem:[#allocation5 + $0x70] sm:$0xf]
        %v729 = vld [vmem:[#allocation5 + $0x74] sm:$0xf]
        %v730 = vld [vmem:[#allocation5 + $0x78] sm:$0xf]
        %v731 = vld [vmem:[#allocation5 + $0x7c] sm:$0xf]
        %v764 = vunpack.c.l.b16 %v700
        %v765 = vunpack.c.l.b16 %v701
        %v766 = vunpack.c.l.b16 %v702
        %v767 = vunpack.c.l.b16 %v703
        %v768 = vunpack.c.l.b16 %v704
        %v769 = vunpack.c.l.b16 %v705
        %v770 = vunpack.c.l.b16 %v706
        %v771 = vunpack.c.l.b16 %v707
        %v772 = vunpack.c.l.b16 %v708
        %v773 = vunpack.c.l.b16 %v709
        %v774 = vunpack.c.l.b16 %v710
        %v775 = vunpack.c.l.b16 %v711
        %v776 = vunpack.c.l.b16 %v712
        %v777 = vunpack.c.l.b16 %v713
        %v778 = vunpack.c.l.b16 %v714
        %v779 = vunpack.c.l.b16 %v715
        %v780 = vunpack.c.l.b16 %v716
        %v781 = vunpack.c.l.b16 %v717
        %v782 = vunpack.c.l.b16 %v718
        %v783 = vunpack.c.l.b16 %v719
        %v784 = vunpack.c.l.b16 %v720
        %v785 = vunpack.c.l.b16 %v721
        %v786 = vunpack.c.l.b16 %v722
        %v787 = vunpack.c.l.b16 %v723
        %v788 = vunpack.c.l.b16 %v724
        %v789 = vunpack.c.l.b16 %v725
        %v790 = vunpack.c.l.b16 %v726
        %v791 = vunpack.c.l.b16 %v727
        %v792 = vunpack.c.l.b16 %v728
        %v793 = vunpack.c.l.b16 %v729
        %v794 = vunpack.c.l.b16 %v730
        %v795 = vunpack.c.l.b16 %v731
        %v796 = vpack.c.b16 %v765, %v764
        %v797 = vpack.c.b16 %v767, %v766
        %v798 = vpack.c.b16 %v769, %v768
        %v799 = vpack.c.b16 %v771, %v770
        %v800 = vpack.c.b16 %v773, %v772
        %v801 = vpack.c.b16 %v775, %v774
        %v802 = vpack.c.b16 %v777, %v776
        %v803 = vpack.c.b16 %v779, %v778
        %v804 = vpack.c.b16 %v781, %v780
        %v805 = vpack.c.b16 %v783, %v782
        %v806 = vpack.c.b16 %v785, %v784
        %v807 = vpack.c.b16 %v787, %v786
        %v808 = vpack.c.b16 %v789, %v788
        %v809 = vpack.c.b16 %v791, %v790
        %v810 = vpack.c.b16 %v793, %v792
        %v811 = vpack.c.b16 %v795, %v794
        %828 = vmatprep.subr.bf16.mxu0 0
        %829 = vmatpush1.bf16.msra.mxu0 %v796
        %830 = vmatprep.subr.bf16.mxu0 0
        %831 = vmatpush1.bf16.msra.mxu0 %v797
        %832 = vmatprep.subr.bf16.mxu0 0
        %833 = vmatpush1.bf16.msra.mxu0 %v798
        %834 = vmatprep.subr.bf16.mxu0 0
        %835 = vmatpush1.bf16.msra.mxu0 %v799
        %836 = vmatprep.subr.bf16.mxu0 0
        %837 = vmatpush1.bf16.msra.mxu0 %v800
        %838 = vmatprep.subr.bf16.mxu0 0
        %839 = vmatpush1.bf16.msra.mxu0 %v801
        %840 = vmatprep.subr.bf16.mxu0 0
        %841 = vmatpush1.bf16.msra.mxu0 %v802
        %842 = vmatprep.subr.bf16.mxu0 0
        %843 = vmatpush1.bf16.msra.mxu0 %v803
        %844 = vmatprep.subr.bf16.mxu0 0
        %845 = vmatpush1.bf16.msra.mxu0 %v804
        %846 = vmatprep.subr.bf16.mxu0 0
        %847 = vmatpush1.bf16.msra.mxu0 %v805
        %848 = vmatprep.subr.bf16.mxu0 0
        %849 = vmatpush1.bf16.msra.mxu0 %v806
        %850 = vmatprep.subr.bf16.mxu0 0
        %851 = vmatpush1.bf16.msra.mxu0 %v807
        %852 = vmatprep.subr.bf16.mxu0 0
        %853 = vmatpush1.bf16.msra.mxu0 %v808
        %854 = vmatprep.subr.bf16.mxu0 0
        %855 = vmatpush1.bf16.msra.mxu0 %v809
        %856 = vmatprep.subr.bf16.mxu0 0
        %857 = vmatpush1.bf16.msra.mxu0 %v810
        %858 = vmatprep.subr.bf16.mxu0 0
        %859 = vmatpush1.bf16.msra.mxu0 %v811
        %860 = vmatprep.mubr.bf16.mxu0 %v693
        %861 = vmatmul.mubr.bf16.gmra.mrb[0].mxu0 %v692
        %v862 = vpop.f32.mrb[0].mxu0
        %v863 = vadd.f32 0.0, %v862
        %v864 = vpop.f32.mrb[0].mxu0
        %v865 = vpop.f32.mrb[0].mxu0
        %v866 = vadd.f32 0.0, %v865
        %v867 = vpop.f32.mrb[0].mxu0
        %868 = vmatprep.mubr.bf16.mxu0 %v695
        %869 = vmatmul.mubr.bf16.gmra.mrb[0].mxu0 %v694
        %v870 = vpop.f32.mrb[0].mxu0
        %v871 = vadd.f32 0.0, %v870
        %v872 = vpop.f32.mrb[0].mxu0
        %v873 = vpop.f32.mrb[0].mxu0
        %v874 = vadd.f32 0.0, %v873
        %v875 = vpop.f32.mrb[0].mxu0
        %876 = vmatprep.mubr.bf16.mxu0 %v697
        %877 = vmatmul.mubr.bf16.gmra.mrb[0].mxu0 %v696
        %v878 = vpop.f32.mrb[0].mxu0
        %v879 = vadd.f32 0.0, %v878
        %v880 = vpop.f32.mrb[0].mxu0
        %v881 = vpop.f32.mrb[0].mxu0
        %v882 = vadd.f32 0.0, %v881
        %v883 = vpop.f32.mrb[0].mxu0
        %884 = vmatprep.mubr.bf16.mxu0 %v699
        %885 = vmatmul.mubr.bf16.gmra.mrb[0].mxu0 %v698
        %v886 = vpop.f32.mrb[0].mxu0
        %v887 = vadd.f32 0.0, %v886
        %v888 = vpop.f32.mrb[0].mxu0
        %v889 = vpop.f32.mrb[0].mxu0
        %v890 = vadd.f32 0.0, %v889
        %v891 = vpop.f32.mrb[0].mxu0
        %892 = vdwg.mxu0
        %v893 = vld [vmem:[%s2] sm:$0x1]
        %v895 = vlaneseq
        %v896 = vshrl.u32 %v895, 7
        %v897 = vsub.s32 0, %v896
        %v898 = vrot.slane %v893, %v897
        %v900 = vmul.f32 %v863, %v898
        %v901 = vmul.f32 %v866, %v898
        %v902 = vmul.f32 %v871, %v898
        %v903 = vmul.f32 %v874, %v898
        %v904 = vmul.f32 %v879, %v898
        %v905 = vmul.f32 %v882, %v898
        %v906 = vmul.f32 %v887, %v898
        %v907 = vmul.f32 %v890, %v898
        %v908 = vld [vmem:[%s3] sm:$0x1]
        %v910 = vlaneseq
        %v911 = vshrl.u32 %v910, 7
        %v912 = vsub.s32 0, %v911
        %v913 = vrot.slane %v908, %v912
        %v915 = vadd.f32 %v900, %v913
        %v916 = vadd.f32 %v901, %v913
        %v917 = vadd.f32 %v902, %v913
        %v918 = vadd.f32 %v903, %v913
        %v919 = vadd.f32 %v904, %v913
        %v920 = vadd.f32 %v905, %v913
        %v921 = vadd.f32 %v906, %v913
        %v922 = vadd.f32 %v907, %v913
        %v923 = vmax.f32 %v915, 0.0
        %v924 = vmax.f32 %v916, 0.0
        %v925 = vmax.f32 %v917, 0.0
        %v926 = vmax.f32 %v918, 0.0
        %v927 = vmax.f32 %v919, 0.0
        %v928 = vmax.f32 %v920, 0.0
        %v929 = vmax.f32 %v921, 0.0
        %v930 = vmax.f32 %v922, 0.0
        %931 = vst [vmem:[%s364] sm:$0xff] %v923
        %932 = vst [vmem:[%s364 + $0x8] sm:$0xff] %v924
        %933 = vst [vmem:[%s364 + $0x10] sm:$0xff] %v925
        %934 = vst [vmem:[%s364 + $0x18] sm:$0xff] %v926
        %935 = vst [vmem:[%s364 + $0x20] sm:$0xff] %v927
        %936 = vst [vmem:[%s364 + $0x28] sm:$0xff] %v928
        %937 = vst [vmem:[%s364 + $0x30] sm:$0xff] %v929
        %938 = vst [vmem:[%s364 + $0x38] sm:$0xff] %v930
        %v939 = vpack.c.bf16 %v635, %v635
        %v940 = vpack.c.bf16 %v636, %v636
        %v941 = vpack.c.bf16 %v637, %v637
        %v942 = vpack.c.bf16 %v638, %v638
        %v943 = vpack.c.bf16 %v639, %v639
        %v944 = vpack.c.bf16 %v640, %v640
        %v945 = vpack.c.bf16 %v641, %v641
        %v946 = vpack.c.bf16 %v642, %v642
        %v947 = vpack.c.bf16 %v643, %v643
        %v948 = vpack.c.bf16 %v644, %v644
        %v949 = vpack.c.bf16 %v645, %v645
        %v950 = vpack.c.bf16 %v646, %v646
        %v951 = vpack.c.bf16 %v647, %v647
        %v952 = vpack.c.bf16 %v648, %v648
        %v953 = vpack.c.bf16 %v649, %v649
        %v954 = vpack.c.bf16 %v650, %v650
        %v955 = vld [vmem:[#allocation7] sm:$0xf]
        %v956 = vld [vmem:[#allocation7 + $0x4] sm:$0xf]
        %v957 = vld [vmem:[#allocation7 + $0x8] sm:$0xf]
        %v958 = vld [vmem:[#allocation7 + $0xc] sm:$0xf]
        %v959 = vld [vmem:[#allocation7 + $0x10] sm:$0xf]
        %v960 = vld [vmem:[#allocation7 + $0x14] sm:$0xf]
        %v961 = vld [vmem:[#allocation7 + $0x18] sm:$0xf]
        %v962 = vld [vmem:[#allocation7 + $0x1c] sm:$0xf]
        %v963 = vld [vmem:[#allocation7 + $0x20] sm:$0xf]
        %v964 = vld [vmem:[#allocation7 + $0x24] sm:$0xf]
        %v965 = vld [vmem:[#allocation7 + $0x28] sm:$0xf]
        %v966 = vld [vmem:[#allocation7 + $0x2c] sm:$0xf]
        %v967 = vld [vmem:[#allocation7 + $0x30] sm:$0xf]
        %v968 = vld [vmem:[#allocation7 + $0x34] sm:$0xf]
        %v969 = vld [vmem:[#allocation7 + $0x38] sm:$0xf]
        %v970 = vld [vmem:[#allocation7 + $0x3c] sm:$0xf]
        %v971 = vld [vmem:[#allocation7 + $0x40] sm:$0xf]
        %v972 = vld [vmem:[#allocation7 + $0x44] sm:$0xf]
        %v973 = vld [vmem:[#allocation7 + $0x48] sm:$0xf]
        %v974 = vld [vmem:[#allocation7 + $0x4c] sm:$0xf]
        %v975 = vld [vmem:[#allocation7 + $0x50] sm:$0xf]
        %v976 = vld [vmem:[#allocation7 + $0x54] sm:$0xf]
        %v977 = vld [vmem:[#allocation7 + $0x58] sm:$0xf]
        %v978 = vld [vmem:[#allocation7 + $0x5c] sm:$0xf]
        %v979 = vld [vmem:[#allocation7 + $0x60] sm:$0xf]
        %v980 = vld [vmem:[#allocation7 + $0x64] sm:$0xf]
        %v981 = vld [vmem:[#allocation7 + $0x68] sm:$0xf]
        %v982 = vld [vmem:[#allocation7 + $0x6c] sm:$0xf]
        %v983 = vld [vmem:[#allocation7 + $0x70] sm:$0xf]
        %v984 = vld [vmem:[#allocation7 + $0x74] sm:$0xf]
        %v985 = vld [vmem:[#allocation7 + $0x78] sm:$0xf]
        %v986 = vld [vmem:[#allocation7 + $0x7c] sm:$0xf]
        %v987 = vld [vmem:[%s5] sm:$0x1]
        %v989 = vlaneseq
        %v990 = vshrl.u32 %v989, 7
        %v991 = vsub.s32 0, %v990
        %v992 = vrot.slane %v987, %v991
        %v1010 = vunpack.c.l.b16 %v939
        %v1011 = vunpack.c.l.b16 %v940
        %v1012 = vunpack.c.l.b16 %v941
        %v1013 = vunpack.c.l.b16 %v942
        %v1014 = vunpack.c.l.b16 %v943
        %v1015 = vunpack.c.l.b16 %v944
        %v1016 = vunpack.c.l.b16 %v945
        %v1017 = vunpack.c.l.b16 %v946
        %v1018 = vunpack.c.l.b16 %v947
        %v1019 = vunpack.c.l.b16 %v948
        %v1020 = vunpack.c.l.b16 %v949
        %v1021 = vunpack.c.l.b16 %v950
        %v1022 = vunpack.c.l.b16 %v951
        %v1023 = vunpack.c.l.b16 %v952
        %v1024 = vunpack.c.l.b16 %v953
        %v1025 = vunpack.c.l.b16 %v954
        %v1026 = vsel %vm667, %v1012, %v1010
        %v1027 = vsel %vm669, %v1014, %v1026
        %v1028 = vsel %vm671, %v1016, %v1027
        %v1029 = vsel %vm673, %v1018, %v1028
        %v1030 = vsel %vm675, %v1020, %v1029
        %v1031 = vsel %vm677, %v1022, %v1030
        %v1032 = vsel %vm679, %v1024, %v1031
        %v1033 = vsel %vm667, %v1013, %v1011
        %v1034 = vsel %vm669, %v1015, %v1033
        %v1035 = vsel %vm671, %v1017, %v1034
        %v1036 = vsel %vm673, %v1019, %v1035
        %v1037 = vsel %vm675, %v1021, %v1036
        %v1038 = vsel %vm677, %v1023, %v1037
        %v1039 = vsel %vm679, %v1025, %v1038
        %v1040 = vpack.c.b16 %v1032, %v1032
        %v1041 = vpack.c.b16 %v1039, %v1039
        %v1076 = vunpack.c.l.b16 %v955
        %v1077 = vunpack.c.l.b16 %v956
        %v1078 = vunpack.c.l.b16 %v957
        %v1079 = vunpack.c.l.b16 %v958
        %v1080 = vunpack.c.l.b16 %v959
        %v1081 = vunpack.c.l.b16 %v960
        %v1082 = vunpack.c.l.b16 %v961
        %v1083 = vunpack.c.l.b16 %v962
        %v1084 = vunpack.c.l.b16 %v963
        %v1085 = vunpack.c.l.b16 %v964
        %v1086 = vunpack.c.l.b16 %v965
        %v1087 = vunpack.c.l.b16 %v966
        %v1088 = vunpack.c.l.b16 %v967
        %v1089 = vunpack.c.l.b16 %v968
        %v1090 = vunpack.c.l.b16 %v969
        %v1091 = vunpack.c.l.b16 %v970
        %v1092 = vunpack.c.l.b16 %v971
        %v1093 = vunpack.c.l.b16 %v972
        %v1094 = vunpack.c.l.b16 %v973
        %v1095 = vunpack.c.l.b16 %v974
        %v1096 = vunpack.c.l.b16 %v975
        %v1097 = vunpack.c.l.b16 %v976
        %v1098 = vunpack.c.l.b16 %v977
        %v1099 = vunpack.c.l.b16 %v978
        %v1100 = vunpack.c.l.b16 %v979
        %v1101 = vunpack.c.l.b16 %v980
        %v1102 = vunpack.c.l.b16 %v981
        %v1103 = vunpack.c.l.b16 %v982
        %v1104 = vunpack.c.l.b16 %v983
        %v1105 = vunpack.c.l.b16 %v984
        %v1106 = vunpack.c.l.b16 %v985
        %v1107 = vunpack.c.l.b16 %v986
        %v1108 = vpack.c.b16 %v1077, %v1076
        %v1109 = vpack.c.b16 %v1079, %v1078
        %v1110 = vpack.c.b16 %v1081, %v1080
        %v1111 = vpack.c.b16 %v1083, %v1082
        %v1112 = vpack.c.b16 %v1085, %v1084
        %v1113 = vpack.c.b16 %v1087, %v1086
        %v1114 = vpack.c.b16 %v1089, %v1088
        %v1115 = vpack.c.b16 %v1091, %v1090
        %v1116 = vpack.c.b16 %v1093, %v1092
        %v1117 = vpack.c.b16 %v1095, %v1094
        %v1118 = vpack.c.b16 %v1097, %v1096
        %v1119 = vpack.c.b16 %v1099, %v1098
        %v1120 = vpack.c.b16 %v1101, %v1100
        %v1121 = vpack.c.b16 %v1103, %v1102
        %v1122 = vpack.c.b16 %v1105, %v1104
        %v1123 = vpack.c.b16 %v1107, %v1106
        %1140 = vmatprep.subr.bf16.mxu0 0
        %1141 = vmatpush1.bf16.msra.mxu0 %v1108
        %1142 = vmatprep.subr.bf16.mxu0 0
        %1143 = vmatpush1.bf16.msra.mxu0 %v1109
        %1144 = vmatprep.subr.bf16.mxu0 0
        %1145 = vmatpush1.bf16.msra.mxu0 %v1110
        %1146 = vmatprep.subr.bf16.mxu0 0
        %1147 = vmatpush1.bf16.msra.mxu0 %v1111
        %1148 = vmatprep.subr.bf16.mxu0 0
        %1149 = vmatpush1.bf16.msra.mxu0 %v1112
        %1150 = vmatprep.subr.bf16.mxu0 0
        %1151 = vmatpush1.bf16.msra.mxu0 %v1113
        %1152 = vmatprep.subr.bf16.mxu0 0
        %1153 = vmatpush1.bf16.msra.mxu0 %v1114
        %1154 = vmatprep.subr.bf16.mxu0 0
        %1155 = vmatpush1.bf16.msra.mxu0 %v1115
        %1156 = vmatprep.subr.bf16.mxu0 0
        %1157 = vmatpush1.bf16.msra.mxu0 %v1116
        %1158 = vmatprep.subr.bf16.mxu0 0
        %1159 = vmatpush1.bf16.msra.mxu0 %v1117
        %1160 = vmatprep.subr.bf16.mxu0 0
        %1161 = vmatpush1.bf16.msra.mxu0 %v1118
        %1162 = vmatprep.subr.bf16.mxu0 0
        %1163 = vmatpush1.bf16.msra.mxu0 %v1119
        %1164 = vmatprep.subr.bf16.mxu0 0
        %1165 = vmatpush1.bf16.msra.mxu0 %v1120
        %1166 = vmatprep.subr.bf16.mxu0 0
        %1167 = vmatpush1.bf16.msra.mxu0 %v1121
        %1168 = vmatprep.subr.bf16.mxu0 0
        %1169 = vmatpush1.bf16.msra.mxu0 %v1122
        %1170 = vmatprep.subr.bf16.mxu0 0
        %1171 = vmatpush1.bf16.msra.mxu0 %v1123
        %1172 = vmatprep.mubr.bf16.mxu0 %v1041
        %1173 = vmatmul.mubr.bf16.gmra.mrb[0].mxu0 %v1040
        %v1174 = vpop.f32.mrb[0].mxu0
        %v1175 = vadd.f32 %v992, %v1174
        %v1176 = vpop.f32.mrb[0].mxu0
        %v1177 = vpop.f32.mrb[0].mxu0
        %v1178 = vpop.f32.mrb[0].mxu0
        %1179 = vdwg.mxu0
        %1180 = vst [vmem:[%s371] sm:$0xff] %v1175
        %s1181 = sand.u32 %s169, 1
        %s1182 = scalar_lea.sflag [#allocation4], %s1181
        %s1183 = sand.u32 %s169, 1
        %s1184 = smul.addr %s1183, 16
        %s1185 = scalar_lea.vmem [#allocation8], %s1184
        %s1186 = sand.u32 %s30, 1
        %s1187 = scalar_lea.sflag [#allocation10], %s1186
        %s1188 = sand.u32 %s195, 1
        %s1189 = smul.addr %s1188, 64
        %s1190 = scalar_lea.vmem [#allocation9], %s1189
        %s1191 = sand.u32 %s30, 1
        %s1192 = scalar_lea.sflag [#allocation10], %s1191
        %s1193 = sand.u32 %s221, 1
        %s1194 = smul.addr %s1193, 8
        %s1195 = scalar_lea.vmem [#allocation11], %s1194
        // Predicated region
        $region57: #{aligned_reid_head.1} parent=43 // pred_check
          %p1196 = pneg %p179
        $region58: #{aligned_reid_head.1} parent=43 // pred_check_branch
          %1198 = sbr.rel (%p1196) target = $region60
        $region59: #{aligned_reid_head.1} parent=43 // pred_region
          %s1200 = ssub.s32 256, 256
          %1201 = vsyncadd %s1182, %s1200
          %s1202 = smul.addr %s30, 2
          %s1203 = smul.addr %s1202, 128
          %s1204 = scalar_lea.hbm %s6, %s1203
          %s1206 = sshll.u32 %s1185, 4
          %s1207 = int_to_ptr.vmem [resolvable:$true] %s1206
          %1209 = dma.vmem_to_hbm [thread:$0]  %s1207, 256, %s1204, %s1182
        $region60: #{aligned_reid_head.1} parent=43 // pred_fallthru
          _
        // Predicated region
        $region61: #{aligned_reid_head.1} parent=43 // pred_check
          %p1210 = pneg %p205
        $region62: #{aligned_reid_head.1} parent=43 // pred_check_branch
          %1212 = sbr.rel (%p1210) target = $region64
        $region63: #{aligned_reid_head.1} parent=43 // pred_region
          %s1213 = smul.u32 8, %s30
          %s1215 = ssub.s32 1024, 1024
          %1216 = vsyncadd %s1187, %s1215
          %s1217 = smul.addr %s1213, 128
          %s1218 = scalar_lea.hbm %s7, %s1217
          %s1219 = sshll.u32 %s1190, 4
          %s1220 = int_to_ptr.vmem [resolvable:$true] %s1219
          %1225 = dma.vmem_to_hbm [thread:$0]  %s1220, 1024, %s1218, %s1187, 128, 128, 8
        $region64: #{aligned_reid_head.1} parent=43 // pred_fallthru
          _
        // Predicated region
        $region65: #{aligned_reid_head.1} parent=43 // pred_check
          %p1226 = pneg %p231
        $region66: #{aligned_reid_head.1} parent=43 // pred_check_branch
          %1228 = sbr.rel (%p1226) target = $region68
        $region67: #{aligned_reid_head.1} parent=43 // pred_region
          %s1230 = ssub.s32 128, 128
          %1231 = vsyncadd %s1192, %s1230
          %s1232 = smul.addr %s30, 128
          %s1233 = scalar_lea.hbm %s8, %s1232
          %s1235 = sshll.u32 %s1195, 4
          %s1236 = int_to_ptr.vmem [resolvable:$true] %s1235
          %1238 = dma.vmem_to_hbm [thread:$0]  %s1236, 128, %s1233, %s1192
        $region68: #{aligned_reid_head.1} parent=43 // pred_fallthru
          _
      $region44: #{aligned_reid_head.1} parent=5 // pred_fallthru
        _
      %p1239 = scmp.le.s32.totalorder 2, %s25
      // Predicated region
      $region69: #{aligned_reid_head.1} parent=5 // pred_check
        %p1240 = pneg %p1239
      $region70: #{aligned_reid_head.1} parent=5 // pred_check_branch
        %1242 = sbr.rel (%p1240) target = $region72
      $region71: #{aligned_reid_head.1} parent=5 // pred_region
        %s1243 = ssub.s32 %s25, 2
        // Predicated region
        $region73: #{aligned_reid_head.1} parent=71 // pred_check
          %p1244 = pneg %p185
        $region74: #{aligned_reid_head.1} parent=71 // pred_check_branch
          %1246 = sbr.rel (%p1244) target = $region76
        $region75: #{aligned_reid_head.1} parent=71 // pred_region
          %s1247 = sand.u32 %s170, 1
          %s1248 = scalar_lea.sflag [#allocation4], %s1247
          %s1249 = sand.u32 %s170, 1
          %s1250 = smul.addr %s1249, 16
          %s1251 = scalar_lea.vmem [#allocation8], %s1250
          %1252 = dma.done %s1248, 256
        $region76: #{aligned_reid_head.1} parent=71 // pred_fallthru
          _
        // Predicated region
        $region77: #{aligned_reid_head.1} parent=71 // pred_check
          %p1253 = pneg %p211
        $region78: #{aligned_reid_head.1} parent=71 // pred_check_branch
          %1255 = sbr.rel (%p1253) target = $region80
        $region79: #{aligned_reid_head.1} parent=71 // pred_region
          %s1256 = sand.u32 %s31, 1
          %s1257 = scalar_lea.sflag [#allocation10], %s1256
          %s1258 = sand.u32 %s196, 1
          %s1259 = smul.addr %s1258, 64
          %s1260 = scalar_lea.vmem [#allocation9], %s1259
          %1261 = dma.done %s1257, 1024
        $region80: #{aligned_reid_head.1} parent=71 // pred_fallthru
          _
        // Predicated region
        $region81: #{aligned_reid_head.1} parent=71 // pred_check
          %p1262 = pneg %p237
        $region82: #{aligned_reid_head.1} parent=71 // pred_check_branch
          %1264 = sbr.rel (%p1262) target = $region84
        $region83: #{aligned_reid_head.1} parent=71 // pred_region
          %s1265 = sand.u32 %s31, 1
          %s1266 = scalar_lea.sflag [#allocation10], %s1265
          %s1267 = sand.u32 %s222, 1
          %s1268 = smul.addr %s1267, 8
          %s1269 = scalar_lea.vmem [#allocation11], %s1268
          %1270 = dma.done %s1266, 128
        $region84: #{aligned_reid_head.1} parent=71 // pred_fallthru
          _
      $region72: #{aligned_reid_head.1} parent=5 // pred_fallthru
        _
    $region6: #{aligned_reid_head.1} parent=1 // loop_footer
      %s29 = sadd.s32 1, %s25
    $region7: #{aligned_reid_head.1} parent=1 // loop_footer_branch
      %24 = sbr.rel target = $region3
    $region8: #{aligned_reid_head.1} parent=1 // loop_exit
      _
    %1271 = vsyncpa [#allocation3], 1
    %s1272 = scalar_lea.sflag [#allocation3], 1
    %1273 = vsyncpa %s1272, 1
    %1274 = vsyncpa [#allocation6], 1
    %1275 = vsyncpa [#allocation4], 1
    %s1276 = scalar_lea.sflag [#allocation4], 1
    %1277 = vsyncpa %s1276, 1
    %1278 = vsyncpa [#allocation10], 1
    %s1279 = scalar_lea.sflag [#allocation10], 1
    %1280 = vsyncpa %s1279, 1

</llo_original>
